<compile_context>
chip_gen: v7x
topology: tpu7x:2x2x1
jax: 0.10.0
libtpu: 0.0.40
codegen_flags: <defaults>
</compile_context>

<pallas_src>
import functools

import jax
import jax.numpy as jnp
import numpy as np
from jax.experimental import pallas as pl
from jax.experimental.pallas import tpu as pltpu

T = 1000        # Monte-Carlo samples (hard-coded in the reference)
TEMP = 0.18     # temperature (hard-coded in the reference)


def _default_n_split():
    """2-way 'parallel' split only on 2-TensorCore chips (v7x); 1 elsewhere."""
    try:
        kind = jax.devices()[0].device_kind.lower()
    except Exception:
        return 1
    return 2 if ("v7" in kind or "7x" in kind) else 1


N_SPLIT = _default_n_split()


def _proto_msm_kernel(mean_ref, var_ref, dist_ref, msm_ref):
    """One grid step handles a block of BM query samples and all T MC draws.

    Layout: class axis C outermost (planes), sample axis BM on sublanes,
    Monte-Carlo axis T lane-dense.

    mean_ref: (C, BM, 1)  f32, raw class means (per query sample)
    var_ref:  (1, BM, 1)  f32, raw per-sample variance
    dist_ref: (C, BM, T)  f32, standard-normal samples
    msm_ref:  (C, BM, 1)  f32 out, sum_t softmax_c(logits)  (/T folded downstream)
    """
    inv_temp = jnp.float32(1.0 / TEMP)
    # Pre-scales on the tiny refs (VPU has huge slack here) -> one FMA per big elem.
    mean_s = mean_ref[...] * inv_temp                         # (C, BM, 1)
    std_s = jnp.sqrt(var_ref[...]) * inv_temp                 # (1, BM, 1)
    logits = mean_s + std_s * dist_ref[...]                   # (C, BM, T)

    # Numerically stable softmax over the class axis (leading dim): elementwise
    # max/add across C=5 planes -> pure VPU, no cross-lane/sublane XLU work.
    mx = jnp.max(logits, axis=0, keepdims=True)               # (1, BM, T)
    e = jnp.exp(logits - mx)                                  # EUP
    denom = jnp.sum(e, axis=0, keepdims=True)                 # (1, BM, T), VPU adds
    # EUP approximate reciprocal + one Newton step: full f32 accuracy, no VPU div.
    inv = pl.reciprocal(denom, approx=True)
    inv = inv * (2.0 - denom * inv)
    p = e * inv                                               # (C, BM, T)

    # Monte-Carlo accumulation: single lane reduce over T per class plane (XLU).
    msm_ref[...] = jnp.sum(p, axis=2, keepdims=True)          # (C, BM, 1)


@functools.partial(jax.jit, static_argnums=(0, 1))
def prototypical_loss_pallas(n_classes, n_query, mean, var, dist):
    """mean: (M, C); var: (M,); dist: (C, M, T) standard-normal samples."""
    M, C = mean.shape
    Tn = dist.shape[-1]
    assert M == n_classes * n_query and C == n_classes
    assert dist.shape == (C, M, Tn)

    # Layout plumbing only (no compute hoisted into the wrapper): present the
    # tiny mean/var arrays in the (C, M, 1)/(1, M, 1) kernel layout.
    mean_cm = jnp.transpose(mean.astype(jnp.float32))[:, :, None]    # (C, M, 1)
    var_r = var.astype(jnp.float32).reshape(1, M, 1)                  # (1, M, 1)
    dist = dist.astype(jnp.float32)

    # Pad M so the N_SPLIT-way split divides evenly (no-op when N_SPLIT == 1).
    bm = -(-M // N_SPLIT)
    m_pad = bm * N_SPLIT
    pad = m_pad - M
    if pad:
        mean_cm = jnp.pad(mean_cm, ((0, 0), (0, pad), (0, 0)))
        var_r = jnp.pad(var_r, ((0, 0), (0, pad), (0, 0)), constant_values=1.0)
        dist = jnp.pad(dist, ((0, 0), (0, pad), (0, 0)))

    msm_sum = pl.pallas_call(
        _proto_msm_kernel,
        out_shape=jax.ShapeDtypeStruct((C, m_pad, 1), jnp.float32),
        grid_spec=pltpu.PrefetchScalarGridSpec(
            num_scalar_prefetch=0,
            grid=(N_SPLIT,),
            in_specs=[
                pl.BlockSpec((C, bm, 1), lambda i: (0, i, 0)),    # mean
                pl.BlockSpec((1, bm, 1), lambda i: (0, i, 0)),    # var
                pl.BlockSpec((C, bm, Tn), lambda i: (0, i, 0)),   # dist, T on lanes
            ],
            out_specs=pl.BlockSpec((C, bm, 1), lambda i: (0, i, 0)),
        ),
        compiler_params=pltpu.CompilerParams(
            dimension_semantics=("parallel",)),
    )(mean_cm, var_r, dist)

    msm_cm = msm_sum[:, :M, 0]                                # (C, M), sum over T

    # Tiny epilogue (O(M*C) = 75 elements) in plain JAX; target smoothing and
    # target indices are trace-time numpy constants (no scatter HLO), /T folded
    # into the log constant, argmax is scale-invariant so it uses msm_cm directly.
    target_inds = np.repeat(np.arange(n_classes), n_query)            # (M,)
    tgt_smooth_cm = np.full((C, M), 0.025, np.float32)
    tgt_smooth_cm[target_inds, np.arange(M)] = 0.9

    logp = jnp.log(msm_cm) - np.float32(np.log(Tn))                   # (C, M)
    loss = jnp.mean(jnp.sum(-logp * tgt_smooth_cm, axis=0))
    acc = jnp.mean((jnp.argmax(msm_cm, axis=0) == target_inds)
                   .astype(jnp.float32))
    return loss, acc


def _reference_jax(n_classes, n_query, mean, var, dist_cmt):
    """Pure-JAX reference mirroring the PyTorch code (dist laid out (C, M, T))."""
    M, C = mean.shape
    dist_tmc = jnp.transpose(dist_cmt, (2, 1, 0))                     # (T, M, C)
    std = jnp.sqrt(var).reshape(1, M, 1)
    logits = (mean[None, :, :] + std * dist_tmc) / TEMP
    mean_softmax = jax.nn.softmax(logits, axis=2).mean(axis=0)        # (M, C)
    logp = jnp.log(mean_softmax)
    target_inds = np.repeat(np.arange(n_classes), n_query)
    tgt_smooth = np.full((M, C), 0.025, np.float32)
    tgt_smooth[np.arange(M), target_inds] = 0.9
    loss = jnp.mean(jnp.sum(-logp * tgt_smooth, axis=1))
    acc = jnp.mean((jnp.argmax(mean_softmax, axis=1) == target_inds)
                   .astype(jnp.float32))
    return loss, acc


if __name__ == "__main__":
    key = jax.random.PRNGKey(0)
    n_classes, n_query = 5, 3          # 5-way, 3 query samples per class
    M = n_classes * n_query            # 15 query samples
    k1, k2, k3 = jax.random.split(key, 3)

    mean = jax.random.normal(k1, (M, n_classes), jnp.float32)
    var = jax.random.uniform(k2, (M,), jnp.float32, minval=0.1, maxval=1.0)
    # Monte-Carlo samples, class-outermost / lane-dense-T layout: (C, M, T).
    dist = jax.random.normal(k3, (n_classes, M, T), jnp.float32)

    loss, acc = prototypical_loss_pallas(n_classes, n_query, mean, var, dist)
    jax.block_until_ready((loss, acc))

    ref_loss, ref_acc = _reference_jax(n_classes, n_query, mean, var, dist)
    np.testing.assert_allclose(np.asarray(loss), np.asarray(ref_loss),
                               rtol=1e-4, atol=1e-5)
    np.testing.assert_allclose(np.asarray(acc), np.asarray(ref_acc),
                               rtol=1e-5, atol=1e-6)

    print("KERNEL_OK")
</pallas_src>

<mosaic_0001>
module attributes {stable_mosaic.version = 11 : i64} {
  func.func @_proto_msm_kernel(%arg0: i32, %arg1: memref<5x15x1xf32, #tpu.memory_space<vmem>>, %arg2: memref<1x15x1xf32, #tpu.memory_space<vmem>>, %arg3: memref<5x15x1000xf32, #tpu.memory_space<vmem>>, %arg4: memref<5x15x1xf32, #tpu.memory_space<vmem>>) attributes {dimension_semantics = [#tpu.dimension_semantics<parallel>], iteration_bounds = array<i64: 1>, scalar_prefetch = 0 : i64, scratch_operands = 0 : i64, tpu.core_type = #tpu.core_type<tc>, window_params = [{transform_indices = @transform_0, window_bounds = array<i64: 5, 15, 1>}, {transform_indices = @transform_1, window_bounds = array<i64: 1, 15, 1>}, {transform_indices = @transform_2, window_bounds = array<i64: 5, 15, 1000>}, {transform_indices = @transform_3, window_bounds = array<i64: 5, 15, 1>}]} {
    %c0 = arith.constant 0 : index
    %c0_0 = arith.constant 0 : index
    %c0_1 = arith.constant 0 : index
    %0 = vector.load %arg1[%c0, %c0_0, %c0_1] : memref<5x15x1xf32, #tpu.memory_space<vmem>>, vector<5x15x1xf32>
    %cst = arith.constant 5.55555534 : f32
    %1 = vector.broadcast %cst : f32 to vector<5x15x1xf32>
    %2 = arith.mulf %0, %1 : vector<5x15x1xf32>
    %c0_2 = arith.constant 0 : index
    %c0_3 = arith.constant 0 : index
    %c0_4 = arith.constant 0 : index
    %3 = vector.load %arg2[%c0_2, %c0_3, %c0_4] : memref<1x15x1xf32, #tpu.memory_space<vmem>>, vector<1x15x1xf32>
    %4 = math.sqrt %3 : vector<1x15x1xf32>
    %cst_5 = arith.constant 5.55555534 : f32
    %5 = vector.broadcast %cst_5 : f32 to vector<1x15x1xf32>
    %6 = arith.mulf %4, %5 : vector<1x15x1xf32>
    %c0_6 = arith.constant 0 : index
    %c0_7 = arith.constant 0 : index
    %c0_8 = arith.constant 0 : index
    %7 = vector.load %arg3[%c0_6, %c0_7, %c0_8] : memref<5x15x1000xf32, #tpu.memory_space<vmem>>, vector<5x15x1000xf32>
    %8 = vector.broadcast %6 : vector<1x15x1xf32> to vector<5x15x1000xf32>
    %9 = arith.mulf %8, %7 : vector<5x15x1000xf32>
    %10 = vector.broadcast %2 : vector<5x15x1xf32> to vector<5x15x1000xf32>
    %11 = arith.addf %10, %9 : vector<5x15x1000xf32>
    %cst_9 = arith.constant dense<0xFF800000> : vector<15x1000xf32>
    %12 = vector.multi_reduction <maximumf>, %11, %cst_9 [0] : vector<5x15x1000xf32> to vector<15x1000xf32>
    %13 = vector.shape_cast %12 : vector<15x1000xf32> to vector<1x15x1000xf32>
    %14 = vector.broadcast %13 : vector<1x15x1000xf32> to vector<5x15x1000xf32>
    %15 = arith.subf %11, %14 : vector<5x15x1000xf32>
    %16 = math.exp %15 : vector<5x15x1000xf32>
    %cst_10 = arith.constant dense<0.000000e+00> : vector<15x1000xf32>
    %17 = vector.multi_reduction <add>, %16, %cst_10 [0] : vector<5x15x1000xf32> to vector<15x1000xf32>
    %18 = vector.shape_cast %17 : vector<15x1000xf32> to vector<1x15x1000xf32>
    %19 = tpu.reciprocal %18 {approx = true} : vector<1x15x1000xf32> -> vector<1x15x1000xf32>
    %20 = arith.mulf %18, %19 : vector<1x15x1000xf32>
    %cst_11 = arith.constant 2.000000e+00 : f32
    %21 = vector.broadcast %cst_11 : f32 to vector<1x15x1000xf32>
    %22 = arith.subf %21, %20 : vector<1x15x1000xf32>
    %23 = arith.mulf %19, %22 : vector<1x15x1000xf32>
    %24 = vector.broadcast %23 : vector<1x15x1000xf32> to vector<5x15x1000xf32>
    %25 = arith.mulf %16, %24 : vector<5x15x1000xf32>
    %cst_12 = arith.constant dense<0.000000e+00> : vector<5x15xf32>
    %26 = vector.multi_reduction <add>, %25, %cst_12 [2] : vector<5x15x1000xf32> to vector<5x15xf32>
    %27 = vector.shape_cast %26 : vector<5x15xf32> to vector<5x15x1xf32>
    %c0_13 = arith.constant 0 : index
    %c0_14 = arith.constant 0 : index
    %c0_15 = arith.constant 0 : index
    %28 = vector.load %arg4[%c0_13, %c0_14, %c0_15] : memref<5x15x1xf32, #tpu.memory_space<vmem>>, vector<5x15x1xf32>
    tpu.vector_store %arg4[%c0_13, %c0_14, %c0_15], %27 {strides = array<i32>} : memref<5x15x1xf32, #tpu.memory_space<vmem>>, vector<5x15x1xf32>,
    return
  }
  func.func @transform_0(%arg0: i32) -> (i32, i32, i32) {
    %c0_i32 = arith.constant 0 : i32
    %c0_i32_0 = arith.constant 0 : i32
    %c0_i32_1 = arith.constant 0 : i32
    return %c0_i32, %arg0, %c0_i32_0 : i32, i32, i32
  }
  func.func @transform_1(%arg0: i32) -> (i32, i32, i32) {
    %c0_i32 = arith.constant 0 : i32
    %c0_i32_0 = arith.constant 0 : i32
    %c0_i32_1 = arith.constant 0 : i32
    return %c0_i32, %arg0, %c0_i32_0 : i32, i32, i32
  }
  func.func @transform_2(%arg0: i32) -> (i32, i32, i32) {
    %c0_i32 = arith.constant 0 : i32
    %c0_i32_0 = arith.constant 0 : i32
    %c0_i32_1 = arith.constant 0 : i32
    return %c0_i32, %arg0, %c0_i32_0 : i32, i32, i32
  }
  func.func @transform_3(%arg0: i32) -> (i32, i32, i32) {
    %c0_i32 = arith.constant 0 : i32
    %c0_i32_0 = arith.constant 0 : i32
    %c0_i32_1 = arith.constant 0 : i32
    return %c0_i32, %arg0, %c0_i32_0 : i32, i32, i32
  }
}

</mosaic_0001>

<llo_original>
// kernel: prototypical_loss_pallas.1
$region0: #{prototypical_loss_pallas.1}
  #allocation0 [shape = 'u32[]', space=smem, size = 0x4, offset = 0x4, fixed_abs, tag = 'smem constant byte address 0x4 - core index']
  #allocation1 [shape = 'u32[144,128]{1,0:T(1,128)}', space=vmem, size = 0x12000, scoped, tag = 'internal scratch']
  %s0 = inlined_call_operand.vmem [shape: f32[5,15,1], index: 0, kind: input, shape index: {}]
  %s1 = inlined_call_operand.vmem [shape: f32[1,15,1], index: 1, kind: input, shape index: {}]
  %s2 = inlined_call_operand.hbm [shape: f32[5,15,1000], index: 2, kind: input, shape index: {}]
  %s3 = inlined_call_operand.vmem [shape: f32[5,15,1], index: 3, kind: output, shape index: {}]
  %s4 = sld [smem:[#allocation0]]
  $region26: #{prototypical_loss_pallas.1} parent=0
    _
  %s6 = ssub.s32 1, %s4
  %s7 = scalar_select 0, %s6, %s4
  $region1: #{prototypical_loss_pallas.1} parent=0
    #allocation2 [shape = 'u8[327680]{0}', space=vmem, size = 0x50000, scoped, tag = 'input window, operand 2, single buffered']
    #allocation3 [shape = 's32[1]{0}', space=sflag, size = 0x4, scoped, tag = 'scoped memory for prototypical_loss_pallas.1']
    %8 = vsyncpa [#allocation3], 0
    // Predicated region
    $region2: #{prototypical_loss_pallas.1} parent=1 // pred_check
      _
    $region3: #{prototypical_loss_pallas.1} parent=1 // pred_check_branch
      %10 = sbr.rel (0) target = $region5
    $region4: #{prototypical_loss_pallas.1} parent=1 // pred_region
      _
    $region5: #{prototypical_loss_pallas.1} parent=1 // pred_fallthru
      _
    // Predicated region
    $region6: #{prototypical_loss_pallas.1} parent=1 // pred_check
      _
    $region7: #{prototypical_loss_pallas.1} parent=1 // pred_check_branch
      %12 = sbr.rel (0) target = $region9
    $region8: #{prototypical_loss_pallas.1} parent=1 // pred_region
      _
    $region9: #{prototypical_loss_pallas.1} parent=1 // pred_fallthru
      _
    // Predicated region
    $region10: #{prototypical_loss_pallas.1} parent=1 // pred_check
      _
    $region11: #{prototypical_loss_pallas.1} parent=1 // pred_check_branch
      %14 = sbr.rel (0) target = $region13
    $region12: #{prototypical_loss_pallas.1} parent=1 // pred_region
      %s16 = ssub.s32 10240, 10240
      %17 = vsyncadd [#allocation3], %s16
      %s18 = sshll.u32 [#allocation2], 4
      %s19 = int_to_ptr.vmem [resolvable:$true] %s18
      %24 = dma.hbm_to_vmem [thread:$0]  %s2, 10240, %s19, [#allocation3], 1024, 1024, 64
    $region13: #{prototypical_loss_pallas.1} parent=1 // pred_fallthru
      _
    // Predicated region
    $region14: #{prototypical_loss_pallas.1} parent=1 // pred_check
      _
    $region15: #{prototypical_loss_pallas.1} parent=1 // pred_check_branch
      %26 = sbr.rel (0) target = $region17
    $region16: #{prototypical_loss_pallas.1} parent=1 // pred_region
      %27 = dma.done [#allocation3], 10240
    $region17: #{prototypical_loss_pallas.1} parent=1 // pred_fallthru
      _
    %v28 = vld [vmem:[%s0] sm:$0xff]
    %v29 = vld [vmem:[%s0 + $0x8] sm:$0x7f]
    %v30 = vld [vmem:[%s0 + $0x10] sm:$0xff]
    %v31 = vld [vmem:[%s0 + $0x18] sm:$0x7f]
    %v32 = vld [vmem:[%s0 + $0x20] sm:$0xff]
    %v33 = vld [vmem:[%s0 + $0x28] sm:$0x7f]
    %v34 = vld [vmem:[%s0 + $0x30] sm:$0xff]
    %v35 = vld [vmem:[%s0 + $0x38] sm:$0x7f]
    %v36 = vld [vmem:[%s0 + $0x40] sm:$0xff]
    %v37 = vld [vmem:[%s0 + $0x48] sm:$0x7f]
    %v38 = vmul.f32 %v28, 5.5555553
    %v39 = vmul.f32 %v29, 5.5555553
    %v40 = vmul.f32 %v30, 5.5555553
    %v41 = vmul.f32 %v31, 5.5555553
    %v42 = vmul.f32 %v32, 5.5555553
    %v43 = vmul.f32 %v33, 5.5555553
    %v44 = vmul.f32 %v34, 5.5555553
    %v45 = vmul.f32 %v35, 5.5555553
    %v46 = vmul.f32 %v36, 5.5555553
    %v47 = vmul.f32 %v37, 5.5555553
    %v48 = vld [vmem:[%s1] sm:$0xff]
    %v49 = vld [vmem:[%s1 + $0x8] sm:$0x7f]
    %v50 = vrsqrt.pop %v48
    %v51 = vmul.f32 %v48, %v50
    %vm52 = vcmp.eq.f32.partialorder %v48, inf
    %v53 = vsel %vm52, %v48, %v51
    %vm54 = vcmp.eq.f32.partialorder %v48, 0.0
    %v55 = vand.u32 %v48, 2147483648
    %v56 = vsel %vm54, %v55, %v53
    %v57 = vrsqrt.pop %v49
    %v58 = vmul.f32 %v49, %v57
    %vm59 = vcmp.eq.f32.partialorder %v49, inf
    %v60 = vsel %vm59, %v49, %v58
    %vm61 = vcmp.eq.f32.partialorder %v49, 0.0
    %v62 = vand.u32 %v49, 2147483648
    %v63 = vsel %vm61, %v62, %v60
    %v64 = vmul.f32 %v56, 5.5555553
    %v65 = vmul.f32 %v63, 5.5555553
    %v66 = vld [vmem:[#allocation2] sm:$0xff]
    %v67 = vld [vmem:[#allocation2 + $0x8] sm:$0xff]
    %v68 = vld [vmem:[#allocation2 + $0x10] sm:$0xff]
    %v69 = vld [vmem:[#allocation2 + $0x18] sm:$0xff]
    %v70 = vld [vmem:[#allocation2 + $0x20] sm:$0xff]
    %v71 = vld [vmem:[#allocation2 + $0x28] sm:$0xff]
    %v72 = vld [vmem:[#allocation2 + $0x30] sm:$0xff]
    %v73 = vld [vmem:[#allocation2 + $0x38] sm:$0xff]
    %v74 = vld [vmem:[#allocation2 + $0x40] sm:$0x7f]
    %v75 = vld [vmem:[#allocation2 + $0x48] sm:$0x7f]
    %v76 = vld [vmem:[#allocation2 + $0x50] sm:$0x7f]
    %v77 = vld [vmem:[#allocation2 + $0x58] sm:$0x7f]
    %v78 = vld [vmem:[#allocation2 + $0x60] sm:$0x7f]
    %v79 = vld [vmem:[#allocation2 + $0x68] sm:$0x7f]
    %v80 = vld [vmem:[#allocation2 + $0x70] sm:$0x7f]
    %v81 = vld [vmem:[#allocation2 + $0x78] sm:$0x7f]
    %v82 = vld [vmem:[#allocation2 + $0x80] sm:$0xff]
    %v83 = vld [vmem:[#allocation2 + $0x88] sm:$0xff]
    %v84 = vld [vmem:[#allocation2 + $0x90] sm:$0xff]
    %v85 = vld [vmem:[#allocation2 + $0x98] sm:$0xff]
    %v86 = vld [vmem:[#allocation2 + $0xa0] sm:$0xff]
    %v87 = vld [vmem:[#allocation2 + $0xa8] sm:$0xff]
    %v88 = vld [vmem:[#allocation2 + $0xb0] sm:$0xff]
    %v89 = vld [vmem:[#allocation2 + $0xb8] sm:$0xff]
    %v90 = vld [vmem:[#allocation2 + $0xc0] sm:$0x7f]
    %v91 = vld [vmem:[#allocation2 + $0xc8] sm:$0x7f]
    %v92 = vld [vmem:[#allocation2 + $0xd0] sm:$0x7f]
    %v93 = vld [vmem:[#allocation2 + $0xd8] sm:$0x7f]
    %v94 = vld [vmem:[#allocation2 + $0xe0] sm:$0x7f]
    %v95 = vld [vmem:[#allocation2 + $0xe8] sm:$0x7f]
    %v96 = vld [vmem:[#allocation2 + $0xf0] sm:$0x7f]
    %v97 = vld [vmem:[#allocation2 + $0xf8] sm:$0x7f]
    %v98 = vld [vmem:[#allocation2 + $0x100] sm:$0xff]
    %v99 = vld [vmem:[#allocation2 + $0x108] sm:$0xff]
    %v100 = vld [vmem:[#allocation2 + $0x110] sm:$0xff]
    %v101 = vld [vmem:[#allocation2 + $0x118] sm:$0xff]
    %v102 = vld [vmem:[#allocation2 + $0x120] sm:$0xff]
    %v103 = vld [vmem:[#allocation2 + $0x128] sm:$0xff]
    %v104 = vld [vmem:[#allocation2 + $0x130] sm:$0xff]
    %v105 = vld [vmem:[#allocation2 + $0x138] sm:$0xff]
    %v106 = vld [vmem:[#allocation2 + $0x140] sm:$0x7f]
    %v107 = vld [vmem:[#allocation2 + $0x148] sm:$0x7f]
    %v108 = vld [vmem:[#allocation2 + $0x150] sm:$0x7f]
    %v109 = vld [vmem:[#allocation2 + $0x158] sm:$0x7f]
    %v110 = vld [vmem:[#allocation2 + $0x160] sm:$0x7f]
    %v111 = vld [vmem:[#allocation2 + $0x168] sm:$0x7f]
    %v112 = vld [vmem:[#allocation2 + $0x170] sm:$0x7f]
    %v113 = vld [vmem:[#allocation2 + $0x178] sm:$0x7f]
    %v114 = vld [vmem:[#allocation2 + $0x180] sm:$0xff]
    %v115 = vld [vmem:[#allocation2 + $0x188] sm:$0xff]
    %v116 = vld [vmem:[#allocation2 + $0x190] sm:$0xff]
    %v117 = vld [vmem:[#allocation2 + $0x198] sm:$0xff]
    %v118 = vld [vmem:[#allocation2 + $0x1a0] sm:$0xff]
    %v119 = vld [vmem:[#allocation2 + $0x1a8] sm:$0xff]
    %v120 = vld [vmem:[#allocation2 + $0x1b0] sm:$0xff]
    %v121 = vld [vmem:[#allocation2 + $0x1b8] sm:$0xff]
    %v122 = vld [vmem:[#allocation2 + $0x1c0] sm:$0x7f]
    %v123 = vld [vmem:[#allocation2 + $0x1c8] sm:$0x7f]
    %v124 = vld [vmem:[#allocation2 + $0x1d0] sm:$0x7f]
    %v125 = vld [vmem:[#allocation2 + $0x1d8] sm:$0x7f]
    %v126 = vld [vmem:[#allocation2 + $0x1e0] sm:$0x7f]
    %v127 = vld [vmem:[#allocation2 + $0x1e8] sm:$0x7f]
    %v128 = vld [vmem:[#allocation2 + $0x1f0] sm:$0x7f]
    %v129 = vld [vmem:[#allocation2 + $0x1f8] sm:$0x7f]
    %v130 = vld [vmem:[#allocation2 + $0x200] sm:$0xff]
    %v131 = vld [vmem:[#allocation2 + $0x208] sm:$0xff]
    %v132 = vld [vmem:[#allocation2 + $0x210] sm:$0xff]
    %v133 = vld [vmem:[#allocation2 + $0x218] sm:$0xff]
    %v134 = vld [vmem:[#allocation2 + $0x220] sm:$0xff]
    %v135 = vld [vmem:[#allocation2 + $0x228] sm:$0xff]
    %v136 = vld [vmem:[#allocation2 + $0x230] sm:$0xff]
    %v137 = vld [vmem:[#allocation2 + $0x238] sm:$0xff]
    %v138 = vld [vmem:[#allocation2 + $0x240] sm:$0x7f]
    %v139 = vld [vmem:[#allocation2 + $0x248] sm:$0x7f]
    %v140 = vld [vmem:[#allocation2 + $0x250] sm:$0x7f]
    %v141 = vld [vmem:[#allocation2 + $0x258] sm:$0x7f]
    %v142 = vld [vmem:[#allocation2 + $0x260] sm:$0x7f]
    %v143 = vld [vmem:[#allocation2 + $0x268] sm:$0x7f]
    %v144 = vld [vmem:[#allocation2 + $0x270] sm:$0x7f]
    %v145 = vld [vmem:[#allocation2 + $0x278] sm:$0x7f]
    %147 = vset.pattern.permute.xlu0 0
    %148 = vperm.xlu0 %147, %v64
    %v149 = vpop.permute.xlu0 %148
    %152 = vset.pattern.permute.xlu0 0
    %153 = vperm.xlu0 %152, %v65
    %v154 = vpop.permute.xlu0 %153
    %v156 = vmul.f32 %v149, %v66
    %v157 = vmul.f32 %v149, %v67
    %v158 = vmul.f32 %v149, %v68
    %v159 = vmul.f32 %v149, %v69
    %v160 = vmul.f32 %v149, %v70
    %v161 = vmul.f32 %v149, %v71
    %v162 = vmul.f32 %v149, %v72
    %v163 = vmul.f32 %v149, %v73
    %v164 = vmul.f32 %v154, %v74
    %v165 = vmul.f32 %v154, %v75
    %v166 = vmul.f32 %v154, %v76
    %v167 = vmul.f32 %v154, %v77
    %v168 = vmul.f32 %v154, %v78
    %v169 = vmul.f32 %v154, %v79
    %v170 = vmul.f32 %v154, %v80
    %v171 = vmul.f32 %v154, %v81
    %v172 = vmul.f32 %v149, %v82
    %v173 = vmul.f32 %v149, %v83
    %v174 = vmul.f32 %v149, %v84
    %v175 = vmul.f32 %v149, %v85
    %v176 = vmul.f32 %v149, %v86
    %v177 = vmul.f32 %v149, %v87
    %v178 = vmul.f32 %v149, %v88
    %v179 = vmul.f32 %v149, %v89
    %v180 = vmul.f32 %v154, %v90
    %v181 = vmul.f32 %v154, %v91
    %v182 = vmul.f32 %v154, %v92
    %v183 = vmul.f32 %v154, %v93
    %v184 = vmul.f32 %v154, %v94
    %v185 = vmul.f32 %v154, %v95
    %v186 = vmul.f32 %v154, %v96
    %v187 = vmul.f32 %v154, %v97
    %v188 = vmul.f32 %v149, %v98
    %v189 = vmul.f32 %v149, %v99
    %v190 = vmul.f32 %v149, %v100
    %v191 = vmul.f32 %v149, %v101
    %v192 = vmul.f32 %v149, %v102
    %v193 = vmul.f32 %v149, %v103
    %v194 = vmul.f32 %v149, %v104
    %v195 = vmul.f32 %v149, %v105
    %v196 = vmul.f32 %v154, %v106
    %v197 = vmul.f32 %v154, %v107
    %v198 = vmul.f32 %v154, %v108
    %v199 = vmul.f32 %v154, %v109
    %v200 = vmul.f32 %v154, %v110
    %v201 = vmul.f32 %v154, %v111
    %v202 = vmul.f32 %v154, %v112
    %v203 = vmul.f32 %v154, %v113
    %v204 = vmul.f32 %v149, %v114
    %v205 = vmul.f32 %v149, %v115
    %v206 = vmul.f32 %v149, %v116
    %v207 = vmul.f32 %v149, %v117
    %v208 = vmul.f32 %v149, %v118
    %v209 = vmul.f32 %v149, %v119
    %v210 = vmul.f32 %v149, %v120
    %v211 = vmul.f32 %v149, %v121
    %v212 = vmul.f32 %v154, %v122
    %v213 = vmul.f32 %v154, %v123
    %v214 = vmul.f32 %v154, %v124
    %v215 = vmul.f32 %v154, %v125
    %v216 = vmul.f32 %v154, %v126
    %v217 = vmul.f32 %v154, %v127
    %v218 = vmul.f32 %v154, %v128
    %v219 = vmul.f32 %v154, %v129
    %v220 = vmul.f32 %v149, %v130
    %v221 = vmul.f32 %v149, %v131
    %v222 = vmul.f32 %v149, %v132
    %v223 = vmul.f32 %v149, %v133
    %v224 = vmul.f32 %v149, %v134
    %v225 = vmul.f32 %v149, %v135
    %v226 = vmul.f32 %v149, %v136
    %v227 = vmul.f32 %v149, %v137
    %v228 = vmul.f32 %v154, %v138
    %v229 = vmul.f32 %v154, %v139
    %v230 = vmul.f32 %v154, %v140
    %v231 = vmul.f32 %v154, %v141
    %v232 = vmul.f32 %v154, %v142
    %v233 = vmul.f32 %v154, %v143
    %v234 = vmul.f32 %v154, %v144
    %v235 = vmul.f32 %v154, %v145
    %237 = vset.pattern.permute.xlu0 0
    %238 = vperm.xlu0 %237, %v38
    %v239 = vpop.permute.xlu0 %238
    %242 = vset.pattern.permute.xlu0 0
    %243 = vperm.xlu0 %242, %v39
    %v244 = vpop.permute.xlu0 %243
    %247 = vset.pattern.permute.xlu0 0
    %248 = vperm.xlu0 %247, %v40
    %v249 = vpop.permute.xlu0 %248
    %252 = vset.pattern.permute.xlu0 0
    %253 = vperm.xlu0 %252, %v41
    %v254 = vpop.permute.xlu0 %253
    %257 = vset.pattern.permute.xlu0 0
    %258 = vperm.xlu0 %257, %v42
    %v259 = vpop.permute.xlu0 %258
    %262 = vset.pattern.permute.xlu0 0
    %263 = vperm.xlu0 %262, %v43
    %v264 = vpop.permute.xlu0 %263
    %267 = vset.pattern.permute.xlu0 0
    %268 = vperm.xlu0 %267, %v44
    %v269 = vpop.permute.xlu0 %268
    %272 = vset.pattern.permute.xlu0 0
    %273 = vperm.xlu0 %272, %v45
    %v274 = vpop.permute.xlu0 %273
    %277 = vset.pattern.permute.xlu0 0
    %278 = vperm.xlu0 %277, %v46
    %v279 = vpop.permute.xlu0 %278
    %282 = vset.pattern.permute.xlu0 0
    %283 = vperm.xlu0 %282, %v47
    %v284 = vpop.permute.xlu0 %283
    %v286 = vadd.f32 %v239, %v156
    %v287 = vadd.f32 %v239, %v157
    %v288 = vadd.f32 %v239, %v158
    %v289 = vadd.f32 %v239, %v159
    %v290 = vadd.f32 %v239, %v160
    %v291 = vadd.f32 %v239, %v161
    %v292 = vadd.f32 %v239, %v162
    %v293 = vadd.f32 %v239, %v163
    %v294 = vadd.f32 %v244, %v164
    %v295 = vadd.f32 %v244, %v165
    %v296 = vadd.f32 %v244, %v166
    %v297 = vadd.f32 %v244, %v167
    %v298 = vadd.f32 %v244, %v168
    %v299 = vadd.f32 %v244, %v169
    %v300 = vadd.f32 %v244, %v170
    %v301 = vadd.f32 %v244, %v171
    %v302 = vadd.f32 %v249, %v172
    %v303 = vadd.f32 %v249, %v173
    %v304 = vadd.f32 %v249, %v174
    %v305 = vadd.f32 %v249, %v175
    %v306 = vadd.f32 %v249, %v176
    %v307 = vadd.f32 %v249, %v177
    %v308 = vadd.f32 %v249, %v178
    %v309 = vadd.f32 %v249, %v179
    %v310 = vadd.f32 %v254, %v180
    %v311 = vadd.f32 %v254, %v181
    %v312 = vadd.f32 %v254, %v182
    %v313 = vadd.f32 %v254, %v183
    %v314 = vadd.f32 %v254, %v184
    %v315 = vadd.f32 %v254, %v185
    %v316 = vadd.f32 %v254, %v186
    %v317 = vadd.f32 %v254, %v187
    %v318 = vadd.f32 %v259, %v188
    %v319 = vadd.f32 %v259, %v189
    %v320 = vadd.f32 %v259, %v190
    %v321 = vadd.f32 %v259, %v191
    %v322 = vadd.f32 %v259, %v192
    %v323 = vadd.f32 %v259, %v193
    %v324 = vadd.f32 %v259, %v194
    %v325 = vadd.f32 %v259, %v195
    %v326 = vadd.f32 %v264, %v196
    %v327 = vadd.f32 %v264, %v197
    %v328 = vadd.f32 %v264, %v198
    %v329 = vadd.f32 %v264, %v199
    %v330 = vadd.f32 %v264, %v200
    %v331 = vadd.f32 %v264, %v201
    %v332 = vadd.f32 %v264, %v202
    %v333 = vadd.f32 %v264, %v203
    %v334 = vadd.f32 %v269, %v204
    %v335 = vadd.f32 %v269, %v205
    %v336 = vadd.f32 %v269, %v206
    %v337 = vadd.f32 %v269, %v207
    %v338 = vadd.f32 %v269, %v208
    %v339 = vadd.f32 %v269, %v209
    %v340 = vadd.f32 %v269, %v210
    %v341 = vadd.f32 %v269, %v211
    %v342 = vadd.f32 %v274, %v212
    %v343 = vadd.f32 %v274, %v213
    %v344 = vadd.f32 %v274, %v214
    %v345 = vadd.f32 %v274, %v215
    %v346 = vadd.f32 %v274, %v216
    %v347 = vadd.f32 %v274, %v217
    %v348 = vadd.f32 %v274, %v218
    %v349 = vadd.f32 %v274, %v219
    %v350 = vadd.f32 %v279, %v220
    %v351 = vadd.f32 %v279, %v221
    %v352 = vadd.f32 %v279, %v222
    %v353 = vadd.f32 %v279, %v223
    %v354 = vadd.f32 %v279, %v224
    %v355 = vadd.f32 %v279, %v225
    %v356 = vadd.f32 %v279, %v226
    %v357 = vadd.f32 %v279, %v227
    %v358 = vadd.f32 %v284, %v228
    %v359 = vadd.f32 %v284, %v229
    %v360 = vadd.f32 %v284, %v230
    %v361 = vadd.f32 %v284, %v231
    %v362 = vadd.f32 %v284, %v232
    %v363 = vadd.f32 %v284, %v233
    %v364 = vadd.f32 %v284, %v234
    %v365 = vadd.f32 %v284, %v235
    %v366 = vmax.f32 %v286, %v302
    %v367 = vmax.f32 %v366, %v318
    %v368 = vmax.f32 %v367, %v334
    %v369 = vmax.f32 %v368, %v350
    %v370 = vmax.f32 %v287, %v303
    %v371 = vmax.f32 %v370, %v319
    %v372 = vmax.f32 %v371, %v335
    %v373 = vmax.f32 %v372, %v351
    %v374 = vmax.f32 %v288, %v304
    %v375 = vmax.f32 %v374, %v320
    %v376 = vmax.f32 %v375, %v336
    %v377 = vmax.f32 %v376, %v352
    %v378 = vmax.f32 %v289, %v305
    %v379 = vmax.f32 %v378, %v321
    %v380 = vmax.f32 %v379, %v337
    %v381 = vmax.f32 %v380, %v353
    %v382 = vmax.f32 %v290, %v306
    %v383 = vmax.f32 %v382, %v322
    %v384 = vmax.f32 %v383, %v338
    %v385 = vmax.f32 %v384, %v354
    %v386 = vmax.f32 %v291, %v307
    %v387 = vmax.f32 %v386, %v323
    %v388 = vmax.f32 %v387, %v339
    %v389 = vmax.f32 %v388, %v355
    %v390 = vmax.f32 %v292, %v308
    %v391 = vmax.f32 %v390, %v324
    %v392 = vmax.f32 %v391, %v340
    %v393 = vmax.f32 %v392, %v356
    %vm394 = vcmask 850944
    %v395 = vsel %vm394, %v293, -inf
    %v396 = vsel %vm394, %v309, -inf
    %v397 = vmax.f32 %v395, %v396
    %v398 = vsel %vm394, %v325, -inf
    %v399 = vmax.f32 %v397, %v398
    %v400 = vsel %vm394, %v341, -inf
    %v401 = vmax.f32 %v399, %v400
    %v402 = vsel %vm394, %v357, -inf
    %v403 = vmax.f32 %v401, %v402
    %vm404 = vcmask 1046528
    %v405 = vsel %vm404, %v294, -inf
    %v406 = vsel %vm404, %v310, -inf
    %v407 = vmax.f32 %v405, %v406
    %v408 = vsel %vm404, %v326, -inf
    %v409 = vmax.f32 %v407, %v408
    %v410 = vsel %vm404, %v342, -inf
    %v411 = vmax.f32 %v409, %v410
    %v412 = vsel %vm404, %v358, -inf
    %v413 = vmax.f32 %v411, %v412
    %v414 = vsel %vm404, %v295, -inf
    %v415 = vsel %vm404, %v311, -inf
    %v416 = vmax.f32 %v414, %v415
    %v417 = vsel %vm404, %v327, -inf
    %v418 = vmax.f32 %v416, %v417
    %v419 = vsel %vm404, %v343, -inf
    %v420 = vmax.f32 %v418, %v419
    %v421 = vsel %vm404, %v359, -inf
    %v422 = vmax.f32 %v420, %v421
    %v423 = vsel %vm404, %v296, -inf
    %v424 = vsel %vm404, %v312, -inf
    %v425 = vmax.f32 %v423, %v424
    %v426 = vsel %vm404, %v328, -inf
    %v427 = vmax.f32 %v425, %v426
    %v428 = vsel %vm404, %v344, -inf
    %v429 = vmax.f32 %v427, %v428
    %v430 = vsel %vm404, %v360, -inf
    %v431 = vmax.f32 %v429, %v430
    %v432 = vsel %vm404, %v297, -inf
    %v433 = vsel %vm404, %v313, -inf
    %v434 = vmax.f32 %v432, %v433
    %v435 = vsel %vm404, %v329, -inf
    %v436 = vmax.f32 %v434, %v435
    %v437 = vsel %vm404, %v345, -inf
    %v438 = vmax.f32 %v436, %v437
    %v439 = vsel %vm404, %v361, -inf
    %v440 = vmax.f32 %v438, %v439
    %v441 = vsel %vm404, %v298, -inf
    %v442 = vsel %vm404, %v314, -inf
    %v443 = vmax.f32 %v441, %v442
    %v444 = vsel %vm404, %v330, -inf
    %v445 = vmax.f32 %v443, %v444
    %v446 = vsel %vm404, %v346, -inf
    %v447 = vmax.f32 %v445, %v446
    %v448 = vsel %vm404, %v362, -inf
    %v449 = vmax.f32 %v447, %v448
    %v450 = vsel %vm404, %v299, -inf
    %v451 = vsel %vm404, %v315, -inf
    %v452 = vmax.f32 %v450, %v451
    %v453 = vsel %vm404, %v331, -inf
    %v454 = vmax.f32 %v452, %v453
    %v455 = vsel %vm404, %v347, -inf
    %v456 = vmax.f32 %v454, %v455
    %v457 = vsel %vm404, %v363, -inf
    %v458 = vmax.f32 %v456, %v457
    %v459 = vsel %vm404, %v300, -inf
    %v460 = vsel %vm404, %v316, -inf
    %v461 = vmax.f32 %v459, %v460
    %v462 = vsel %vm404, %v332, -inf
    %v463 = vmax.f32 %v461, %v462
    %v464 = vsel %vm404, %v348, -inf
    %v465 = vmax.f32 %v463, %v464
    %v466 = vsel %vm404, %v364, -inf
    %v467 = vmax.f32 %v465, %v466
    %vm468 = vcmask 849920
    %v469 = vsel %vm468, %v301, -inf
    %v470 = vsel %vm468, %v317, -inf
    %v471 = vmax.f32 %v469, %v470
    %v472 = vsel %vm468, %v333, -inf
    %v473 = vmax.f32 %v471, %v472
    %v474 = vsel %vm468, %v349, -inf
    %v475 = vmax.f32 %v473, %v474
    %v476 = vsel %vm468, %v365, -inf
    %v477 = vmax.f32 %v475, %v476
    %v478 = vsub.f32 %v286, %v369
    %v479 = vsub.f32 %v287, %v373
    %v480 = vsub.f32 %v288, %v377
    %v481 = vsub.f32 %v289, %v381
    %v482 = vsub.f32 %v290, %v385
    %v483 = vsub.f32 %v291, %v389
    %v484 = vsub.f32 %v292, %v393
    %v485 = vsub.f32 %v293, %v403
    %v486 = vsub.f32 %v294, %v413
    %v487 = vsub.f32 %v295, %v422
    %v488 = vsub.f32 %v296, %v431
    %v489 = vsub.f32 %v297, %v440
    %v490 = vsub.f32 %v298, %v449
    %v491 = vsub.f32 %v299, %v458
    %v492 = vsub.f32 %v300, %v467
    %v493 = vsub.f32 %v301, %v477
    %v494 = vsub.f32 %v302, %v369
    %v495 = vsub.f32 %v303, %v373
    %v496 = vsub.f32 %v304, %v377
    %v497 = vsub.f32 %v305, %v381
    %v498 = vsub.f32 %v306, %v385
    %v499 = vsub.f32 %v307, %v389
    %v500 = vsub.f32 %v308, %v393
    %v501 = vsub.f32 %v309, %v403
    %v502 = vsub.f32 %v310, %v413
    %v503 = vsub.f32 %v311, %v422
    %v504 = vsub.f32 %v312, %v431
    %v505 = vsub.f32 %v313, %v440
    %v506 = vsub.f32 %v314, %v449
    %v507 = vsub.f32 %v315, %v458
    %v508 = vsub.f32 %v316, %v467
    %v509 = vsub.f32 %v317, %v477
    %v510 = vsub.f32 %v318, %v369
    %v511 = vsub.f32 %v319, %v373
    %v512 = vsub.f32 %v320, %v377
    %v513 = vsub.f32 %v321, %v381
    %v514 = vsub.f32 %v322, %v385
    %v515 = vsub.f32 %v323, %v389
    %v516 = vsub.f32 %v324, %v393
    %v517 = vsub.f32 %v325, %v403
    %v518 = vsub.f32 %v326, %v413
    %v519 = vsub.f32 %v327, %v422
    %v520 = vsub.f32 %v328, %v431
    %v521 = vsub.f32 %v329, %v440
    %v522 = vsub.f32 %v330, %v449
    %v523 = vsub.f32 %v331, %v458
    %v524 = vsub.f32 %v332, %v467
    %v525 = vsub.f32 %v333, %v477
    %v526 = vsub.f32 %v334, %v369
    %v527 = vsub.f32 %v335, %v373
    %v528 = vsub.f32 %v336, %v377
    %v529 = vsub.f32 %v337, %v381
    %v530 = vsub.f32 %v338, %v385
    %v531 = vsub.f32 %v339, %v389
    %v532 = vsub.f32 %v340, %v393
    %v533 = vsub.f32 %v341, %v403
    %v534 = vsub.f32 %v342, %v413
    %v535 = vsub.f32 %v343, %v422
    %v536 = vsub.f32 %v344, %v431
    %v537 = vsub.f32 %v345, %v440
    %v538 = vsub.f32 %v346, %v449
    %v539 = vsub.f32 %v347, %v458
    %v540 = vsub.f32 %v348, %v467
    %v541 = vsub.f32 %v349, %v477
    %v542 = vsub.f32 %v350, %v369
    %v543 = vsub.f32 %v351, %v373
    %v544 = vsub.f32 %v352, %v377
    %v545 = vsub.f32 %v353, %v381
    %v546 = vsub.f32 %v354, %v385
    %v547 = vsub.f32 %v355, %v389
    %v548 = vsub.f32 %v356, %v393
    %v549 = vsub.f32 %v357, %v403
    %v550 = vsub.f32 %v358, %v413
    %v551 = vsub.f32 %v359, %v422
    %v552 = vsub.f32 %v360, %v431
    %v553 = vsub.f32 %v361, %v440
    %v554 = vsub.f32 %v362, %v449
    %v555 = vsub.f32 %v363, %v458
    %v556 = vsub.f32 %v364, %v467
    %v557 = vsub.f32 %v365, %v477
    %v558 = vmul.f32 %v478, 1.442695
    %v559 = vpow.pop %v558
    %v560 = vmul.f32 %v479, 1.442695
    %v561 = vpow.pop %v560
    %v562 = vmul.f32 %v480, 1.442695
    %v563 = vpow.pop %v562
    %v564 = vmul.f32 %v481, 1.442695
    %v565 = vpow.pop %v564
    %v566 = vmul.f32 %v482, 1.442695
    %v567 = vpow.pop %v566
    %v568 = vmul.f32 %v483, 1.442695
    %v569 = vpow.pop %v568
    %v570 = vmul.f32 %v484, 1.442695
    %v571 = vpow.pop %v570
    %v572 = vmul.f32 %v485, 1.442695
    %v573 = vpow.pop %v572
    %v574 = vmul.f32 %v486, 1.442695
    %v575 = vpow.pop %v574
    %v576 = vmul.f32 %v487, 1.442695
    %v577 = vpow.pop %v576
    %v578 = vmul.f32 %v488, 1.442695
    %v579 = vpow.pop %v578
    %v580 = vmul.f32 %v489, 1.442695
    %v581 = vpow.pop %v580
    %v582 = vmul.f32 %v490, 1.442695
    %v583 = vpow.pop %v582
    %v584 = vmul.f32 %v491, 1.442695
    %v585 = vpow.pop %v584
    %v586 = vmul.f32 %v492, 1.442695
    %v587 = vpow.pop %v586
    %v588 = vmul.f32 %v493, 1.442695
    %v589 = vpow.pop %v588
    %v590 = vmul.f32 %v494, 1.442695
    %v591 = vpow.pop %v590
    %v592 = vmul.f32 %v495, 1.442695
    %v593 = vpow.pop %v592
    %v594 = vmul.f32 %v496, 1.442695
    %v595 = vpow.pop %v594
    %v596 = vmul.f32 %v497, 1.442695
    %v597 = vpow.pop %v596
    %v598 = vmul.f32 %v498, 1.442695
    %v599 = vpow.pop %v598
    %v600 = vmul.f32 %v499, 1.442695
    %v601 = vpow.pop %v600
    %v602 = vmul.f32 %v500, 1.442695
    %v603 = vpow.pop %v602
    %v604 = vmul.f32 %v501, 1.442695
    %v605 = vpow.pop %v604
    %v606 = vmul.f32 %v502, 1.442695
    %v607 = vpow.pop %v606
    %v608 = vmul.f32 %v503, 1.442695
    %v609 = vpow.pop %v608
    %v610 = vmul.f32 %v504, 1.442695
    %v611 = vpow.pop %v610
    %v612 = vmul.f32 %v505, 1.442695
    %v613 = vpow.pop %v612
    %v614 = vmul.f32 %v506, 1.442695
    %v615 = vpow.pop %v614
    %v616 = vmul.f32 %v507, 1.442695
    %v617 = vpow.pop %v616
    %v618 = vmul.f32 %v508, 1.442695
    %v619 = vpow.pop %v618
    %v620 = vmul.f32 %v509, 1.442695
    %v621 = vpow.pop %v620
    %v622 = vmul.f32 %v510, 1.442695
    %v623 = vpow.pop %v622
    %v624 = vmul.f32 %v511, 1.442695
    %v625 = vpow.pop %v624
    %v626 = vmul.f32 %v512, 1.442695
    %v627 = vpow.pop %v626
    %v628 = vmul.f32 %v513, 1.442695
    %v629 = vpow.pop %v628
    %v630 = vmul.f32 %v514, 1.442695
    %v631 = vpow.pop %v630
    %v632 = vmul.f32 %v515, 1.442695
    %v633 = vpow.pop %v632
    %v634 = vmul.f32 %v516, 1.442695
    %v635 = vpow.pop %v634
    %v636 = vmul.f32 %v517, 1.442695
    %v637 = vpow.pop %v636
    %v638 = vmul.f32 %v518, 1.442695
    %v639 = vpow.pop %v638
    %v640 = vmul.f32 %v519, 1.442695
    %v641 = vpow.pop %v640
    %v642 = vmul.f32 %v520, 1.442695
    %v643 = vpow.pop %v642
    %v644 = vmul.f32 %v521, 1.442695
    %v645 = vpow.pop %v644
    %v646 = vmul.f32 %v522, 1.442695
    %v647 = vpow.pop %v646
    %v648 = vmul.f32 %v523, 1.442695
    %v649 = vpow.pop %v648
    %v650 = vmul.f32 %v524, 1.442695
    %v651 = vpow.pop %v650
    %v652 = vmul.f32 %v525, 1.442695
    %v653 = vpow.pop %v652
    %v654 = vmul.f32 %v526, 1.442695
    %v655 = vpow.pop %v654
    %v656 = vmul.f32 %v527, 1.442695
    %v657 = vpow.pop %v656
    %v658 = vmul.f32 %v528, 1.442695
    %v659 = vpow.pop %v658
    %v660 = vmul.f32 %v529, 1.442695
    %v661 = vpow.pop %v660
    %v662 = vmul.f32 %v530, 1.442695
    %v663 = vpow.pop %v662
    %v664 = vmul.f32 %v531, 1.442695
    %v665 = vpow.pop %v664
    %v666 = vmul.f32 %v532, 1.442695
    %v667 = vpow.pop %v666
    %v668 = vmul.f32 %v533, 1.442695
    %v669 = vpow.pop %v668
    %v670 = vmul.f32 %v534, 1.442695
    %v671 = vpow.pop %v670
    %v672 = vmul.f32 %v535, 1.442695
    %v673 = vpow.pop %v672
    %v674 = vmul.f32 %v536, 1.442695
    %v675 = vpow.pop %v674
    %v676 = vmul.f32 %v537, 1.442695
    %v677 = vpow.pop %v676
    %v678 = vmul.f32 %v538, 1.442695
    %v679 = vpow.pop %v678
    %v680 = vmul.f32 %v539, 1.442695
    %v681 = vpow.pop %v680
    %v682 = vmul.f32 %v540, 1.442695
    %v683 = vpow.pop %v682
    %v684 = vmul.f32 %v541, 1.442695
    %v685 = vpow.pop %v684
    %v686 = vmul.f32 %v542, 1.442695
    %v687 = vpow.pop %v686
    %v688 = vmul.f32 %v543, 1.442695
    %v689 = vpow.pop %v688
    %v690 = vmul.f32 %v544, 1.442695
    %v691 = vpow.pop %v690
    %v692 = vmul.f32 %v545, 1.442695
    %v693 = vpow.pop %v692
    %v694 = vmul.f32 %v546, 1.442695
    %v695 = vpow.pop %v694
    %v696 = vmul.f32 %v547, 1.442695
    %v697 = vpow.pop %v696
    %v698 = vmul.f32 %v548, 1.442695
    %v699 = vpow.pop %v698
    %v700 = vmul.f32 %v549, 1.442695
    %v701 = vpow.pop %v700
    %v702 = vmul.f32 %v550, 1.442695
    %v703 = vpow.pop %v702
    %v704 = vmul.f32 %v551, 1.442695
    %v705 = vpow.pop %v704
    %v706 = vmul.f32 %v552, 1.442695
    %v707 = vpow.pop %v706
    %v708 = vmul.f32 %v553, 1.442695
    %v709 = vpow.pop %v708
    %v710 = vmul.f32 %v554, 1.442695
    %v711 = vpow.pop %v710
    %v712 = vmul.f32 %v555, 1.442695
    %v713 = vpow.pop %v712
    %v714 = vmul.f32 %v556, 1.442695
    %v715 = vpow.pop %v714
    %v716 = vmul.f32 %v557, 1.442695
    %v717 = vpow.pop %v716
    %v718 = vadd.f32 %v559, %v591
    %v719 = vadd.f32 %v718, %v623
    %v720 = vadd.f32 %v719, %v655
    %v721 = vadd.f32 %v720, %v687
    %v722 = vadd.f32 %v561, %v593
    %v723 = vadd.f32 %v722, %v625
    %v724 = vadd.f32 %v723, %v657
    %v725 = vadd.f32 %v724, %v689
    %v726 = vadd.f32 %v563, %v595
    %v727 = vadd.f32 %v726, %v627
    %v728 = vadd.f32 %v727, %v659
    %v729 = vadd.f32 %v728, %v691
    %v730 = vadd.f32 %v565, %v597
    %v731 = vadd.f32 %v730, %v629
    %v732 = vadd.f32 %v731, %v661
    %v733 = vadd.f32 %v732, %v693
    %v734 = vadd.f32 %v567, %v599
    %v735 = vadd.f32 %v734, %v631
    %v736 = vadd.f32 %v735, %v663
    %v737 = vadd.f32 %v736, %v695
    %v738 = vadd.f32 %v569, %v601
    %v739 = vadd.f32 %v738, %v633
    %v740 = vadd.f32 %v739, %v665
    %v741 = vadd.f32 %v740, %v697
    %v742 = vadd.f32 %v571, %v603
    %v743 = vadd.f32 %v742, %v635
    %v744 = vadd.f32 %v743, %v667
    %v745 = vadd.f32 %v744, %v699
    %v746 = vsel %vm394, %v573, 0.0
    %v747 = vsel %vm394, %v605, 0.0
    %v748 = vadd.f32 %v746, %v747
    %v749 = vsel %vm394, %v637, 0.0
    %v750 = vadd.f32 %v748, %v749
    %v751 = vsel %vm394, %v669, 0.0
    %v752 = vadd.f32 %v750, %v751
    %v753 = vsel %vm394, %v701, 0.0
    %v754 = vadd.f32 %v752, %v753
    %v755 = vsel %vm404, %v575, 0.0
    %v756 = vsel %vm404, %v607, 0.0
    %v757 = vadd.f32 %v755, %v756
    %v758 = vsel %vm404, %v639, 0.0
    %v759 = vadd.f32 %v757, %v758
    %v760 = vsel %vm404, %v671, 0.0
    %v761 = vadd.f32 %v759, %v760
    %v762 = vsel %vm404, %v703, 0.0
    %v763 = vadd.f32 %v761, %v762
    %v764 = vsel %vm404, %v577, 0.0
    %v765 = vsel %vm404, %v609, 0.0
    %v766 = vadd.f32 %v764, %v765
    %v767 = vsel %vm404, %v641, 0.0
    %v768 = vadd.f32 %v766, %v767
    %v769 = vsel %vm404, %v673, 0.0
    %v770 = vadd.f32 %v768, %v769
    %v771 = vsel %vm404, %v705, 0.0
    %v772 = vadd.f32 %v770, %v771
    %v773 = vsel %vm404, %v579, 0.0
    %v774 = vsel %vm404, %v611, 0.0
    %v775 = vadd.f32 %v773, %v774
    %v776 = vsel %vm404, %v643, 0.0
    %v777 = vadd.f32 %v775, %v776
    %v778 = vsel %vm404, %v675, 0.0
    %v779 = vadd.f32 %v777, %v778
    %v780 = vsel %vm404, %v707, 0.0
    %v781 = vadd.f32 %v779, %v780
    %v782 = vsel %vm404, %v581, 0.0
    %v783 = vsel %vm404, %v613, 0.0
    %v784 = vadd.f32 %v782, %v783
    %v785 = vsel %vm404, %v645, 0.0
    %v786 = vadd.f32 %v784, %v785
    %v787 = vsel %vm404, %v677, 0.0
    %v788 = vadd.f32 %v786, %v787
    %v789 = vsel %vm404, %v709, 0.0
    %v790 = vadd.f32 %v788, %v789
    %v791 = vsel %vm404, %v583, 0.0
    %v792 = vsel %vm404, %v615, 0.0
    %v793 = vadd.f32 %v791, %v792
    %v794 = vsel %vm404, %v647, 0.0
    %v795 = vadd.f32 %v793, %v794
    %v796 = vsel %vm404, %v679, 0.0
    %v797 = vadd.f32 %v795, %v796
    %v798 = vsel %vm404, %v711, 0.0
    %v799 = vadd.f32 %v797, %v798
    %v800 = vsel %vm404, %v585, 0.0
    %v801 = vsel %vm404, %v617, 0.0
    %v802 = vadd.f32 %v800, %v801
    %v803 = vsel %vm404, %v649, 0.0
    %v804 = vadd.f32 %v802, %v803
    %v805 = vsel %vm404, %v681, 0.0
    %v806 = vadd.f32 %v804, %v805
    %v807 = vsel %vm404, %v713, 0.0
    %v808 = vadd.f32 %v806, %v807
    %v809 = vsel %vm404, %v587, 0.0
    %v810 = vsel %vm404, %v619, 0.0
    %v811 = vadd.f32 %v809, %v810
    %v812 = vsel %vm404, %v651, 0.0
    %v813 = vadd.f32 %v811, %v812
    %v814 = vsel %vm404, %v683, 0.0
    %v815 = vadd.f32 %v813, %v814
    %v816 = vsel %vm404, %v715, 0.0
    %v817 = vadd.f32 %v815, %v816
    %v818 = vsel %vm468, %v589, 0.0
    %v819 = vsel %vm468, %v621, 0.0
    %v820 = vadd.f32 %v818, %v819
    %v821 = vsel %vm468, %v653, 0.0
    %v822 = vadd.f32 %v820, %v821
    %v823 = vsel %vm468, %v685, 0.0
    %v824 = vadd.f32 %v822, %v823
    %v825 = vsel %vm468, %v717, 0.0
    %v826 = vadd.f32 %v824, %v825
    %v827 = vrcp.pop %v721
    %v828 = vrcp.pop %v725
    %v829 = vrcp.pop %v729
    %v830 = vrcp.pop %v733
    %v831 = vrcp.pop %v737
    %v832 = vrcp.pop %v741
    %v833 = vrcp.pop %v745
    %v834 = vrcp.pop %v754
    %v835 = vrcp.pop %v763
    %v836 = vrcp.pop %v772
    %v837 = vrcp.pop %v781
    %v838 = vrcp.pop %v790
    %v839 = vrcp.pop %v799
    %v840 = vrcp.pop %v808
    %v841 = vrcp.pop %v817
    %v842 = vrcp.pop %v826
    %v843 = vmul.f32 %v721, %v827
    %v844 = vmul.f32 %v725, %v828
    %v845 = vmul.f32 %v729, %v829
    %v846 = vmul.f32 %v733, %v830
    %v847 = vmul.f32 %v737, %v831
    %v848 = vmul.f32 %v741, %v832
    %v849 = vmul.f32 %v745, %v833
    %v850 = vmul.f32 %v754, %v834
    %v851 = vmul.f32 %v763, %v835
    %v852 = vmul.f32 %v772, %v836
    %v853 = vmul.f32 %v781, %v837
    %v854 = vmul.f32 %v790, %v838
    %v855 = vmul.f32 %v799, %v839
    %v856 = vmul.f32 %v808, %v840
    %v857 = vmul.f32 %v817, %v841
    %v858 = vmul.f32 %v826, %v842
    %v859 = vsub.f32 2.0, %v843
    %v860 = vsub.f32 2.0, %v844
    %v861 = vsub.f32 2.0, %v845
    %v862 = vsub.f32 2.0, %v846
    %v863 = vsub.f32 2.0, %v847
    %v864 = vsub.f32 2.0, %v848
    %v865 = vsub.f32 2.0, %v849
    %v866 = vsub.f32 2.0, %v850
    %v867 = vsub.f32 2.0, %v851
    %v868 = vsub.f32 2.0, %v852
    %v869 = vsub.f32 2.0, %v853
    %v870 = vsub.f32 2.0, %v854
    %v871 = vsub.f32 2.0, %v855
    %v872 = vsub.f32 2.0, %v856
    %v873 = vsub.f32 2.0, %v857
    %v874 = vsub.f32 2.0, %v858
    %v875 = vmul.f32 %v827, %v859
    %v876 = vmul.f32 %v828, %v860
    %v877 = vmul.f32 %v829, %v861
    %v878 = vmul.f32 %v830, %v862
    %v879 = vmul.f32 %v831, %v863
    %v880 = vmul.f32 %v832, %v864
    %v881 = vmul.f32 %v833, %v865
    %v882 = vmul.f32 %v834, %v866
    %v883 = vmul.f32 %v835, %v867
    %v884 = vmul.f32 %v836, %v868
    %v885 = vmul.f32 %v837, %v869
    %v886 = vmul.f32 %v838, %v870
    %v887 = vmul.f32 %v839, %v871
    %v888 = vmul.f32 %v840, %v872
    %v889 = vmul.f32 %v841, %v873
    %v890 = vmul.f32 %v842, %v874
    %v891 = vmul.f32 %v559, %v875
    %v892 = vmul.f32 %v561, %v876
    %v893 = vmul.f32 %v563, %v877
    %v894 = vmul.f32 %v565, %v878
    %v895 = vmul.f32 %v567, %v879
    %v896 = vmul.f32 %v569, %v880
    %v897 = vmul.f32 %v571, %v881
    %v898 = vmul.f32 %v573, %v882
    %v899 = vmul.f32 %v575, %v883
    %v900 = vmul.f32 %v577, %v884
    %v901 = vmul.f32 %v579, %v885
    %v902 = vmul.f32 %v581, %v886
    %v903 = vmul.f32 %v583, %v887
    %v904 = vmul.f32 %v585, %v888
    %v905 = vmul.f32 %v587, %v889
    %v906 = vmul.f32 %v589, %v890
    %v907 = vmul.f32 %v591, %v875
    %v908 = vmul.f32 %v593, %v876
    %v909 = vmul.f32 %v595, %v877
    %v910 = vmul.f32 %v597, %v878
    %v911 = vmul.f32 %v599, %v879
    %v912 = vmul.f32 %v601, %v880
    %v913 = vmul.f32 %v603, %v881
    %v914 = vmul.f32 %v605, %v882
    %v915 = vmul.f32 %v607, %v883
    %v916 = vmul.f32 %v609, %v884
    %v917 = vmul.f32 %v611, %v885
    %v918 = vmul.f32 %v613, %v886
    %v919 = vmul.f32 %v615, %v887
    %v920 = vmul.f32 %v617, %v888
    %v921 = vmul.f32 %v619, %v889
    %v922 = vmul.f32 %v621, %v890
    %v923 = vmul.f32 %v623, %v875
    %v924 = vmul.f32 %v625, %v876
    %v925 = vmul.f32 %v627, %v877
    %v926 = vmul.f32 %v629, %v878
    %v927 = vmul.f32 %v631, %v879
    %v928 = vmul.f32 %v633, %v880
    %v929 = vmul.f32 %v635, %v881
    %v930 = vmul.f32 %v637, %v882
    %v931 = vmul.f32 %v639, %v883
    %v932 = vmul.f32 %v641, %v884
    %v933 = vmul.f32 %v643, %v885
    %v934 = vmul.f32 %v645, %v886
    %v935 = vmul.f32 %v647, %v887
    %v936 = vmul.f32 %v649, %v888
    %v937 = vmul.f32 %v651, %v889
    %v938 = vmul.f32 %v653, %v890
    %v939 = vmul.f32 %v655, %v875
    %v940 = vmul.f32 %v657, %v876
    %v941 = vmul.f32 %v659, %v877
    %v942 = vmul.f32 %v661, %v878
    %v943 = vmul.f32 %v663, %v879
    %v944 = vmul.f32 %v665, %v880
    %v945 = vmul.f32 %v667, %v881
    %v946 = vmul.f32 %v669, %v882
    %v947 = vmul.f32 %v671, %v883
    %v948 = vmul.f32 %v673, %v884
    %v949 = vmul.f32 %v675, %v885
    %v950 = vmul.f32 %v677, %v886
    %v951 = vmul.f32 %v679, %v887
    %v952 = vmul.f32 %v681, %v888
    %v953 = vmul.f32 %v683, %v889
    %v954 = vmul.f32 %v685, %v890
    %v955 = vmul.f32 %v687, %v875
    %v956 = vmul.f32 %v689, %v876
    %v957 = vmul.f32 %v691, %v877
    %v958 = vmul.f32 %v693, %v878
    %v959 = vmul.f32 %v695, %v879
    %v960 = vmul.f32 %v697, %v880
    %v961 = vmul.f32 %v699, %v881
    %v962 = vmul.f32 %v701, %v882
    %v963 = vmul.f32 %v703, %v883
    %v964 = vmul.f32 %v705, %v884
    %v965 = vmul.f32 %v707, %v885
    %v966 = vmul.f32 %v709, %v886
    %v967 = vmul.f32 %v711, %v887
    %v968 = vmul.f32 %v713, %v888
    %v969 = vmul.f32 %v715, %v889
    %v970 = vmul.f32 %v717, %v890
    %v971 = vadd.f32 %v891, %v892
    %v972 = vadd.f32 %v971, %v893
    %v973 = vadd.f32 %v972, %v894
    %v974 = vadd.f32 %v973, %v895
    %v975 = vadd.f32 %v974, %v896
    %v976 = vadd.f32 %v975, %v897
    %v977 = vsel %vm394, %v898, 0.0
    %v978 = vadd.f32 %v976, %v977
    %979 = vadd.xlane.f32.xlu0 %v978
    %v980 = vpop.xlane.xlu0 %979
    %v981 = vsel %vm404, %v899, 0.0
    %v982 = vsel %vm404, %v900, 0.0
    %v983 = vadd.f32 %v981, %v982
    %v984 = vsel %vm404, %v901, 0.0
    %v985 = vadd.f32 %v983, %v984
    %v986 = vsel %vm404, %v902, 0.0
    %v987 = vadd.f32 %v985, %v986
    %v988 = vsel %vm404, %v903, 0.0
    %v989 = vadd.f32 %v987, %v988
    %v990 = vsel %vm404, %v904, 0.0
    %v991 = vadd.f32 %v989, %v990
    %v992 = vsel %vm404, %v905, 0.0
    %v993 = vadd.f32 %v991, %v992
    %v994 = vsel %vm468, %v906, 0.0
    %v995 = vadd.f32 %v993, %v994
    %996 = vadd.xlane.f32.xlu0 %v995
    %v997 = vpop.xlane.xlu0 %996
    %v998 = vadd.f32 %v907, %v908
    %v999 = vadd.f32 %v998, %v909
    %v1000 = vadd.f32 %v999, %v910
    %v1001 = vadd.f32 %v1000, %v911
    %v1002 = vadd.f32 %v1001, %v912
    %v1003 = vadd.f32 %v1002, %v913
    %v1004 = vsel %vm394, %v914, 0.0
    %v1005 = vadd.f32 %v1003, %v1004
    %1006 = vadd.xlane.f32.xlu0 %v1005
    %v1007 = vpop.xlane.xlu0 %1006
    %v1008 = vsel %vm404, %v915, 0.0
    %v1009 = vsel %vm404, %v916, 0.0
    %v1010 = vadd.f32 %v1008, %v1009
    %v1011 = vsel %vm404, %v917, 0.0
    %v1012 = vadd.f32 %v1010, %v1011
    %v1013 = vsel %vm404, %v918, 0.0
    %v1014 = vadd.f32 %v1012, %v1013
    %v1015 = vsel %vm404, %v919, 0.0
    %v1016 = vadd.f32 %v1014, %v1015
    %v1017 = vsel %vm404, %v920, 0.0
    %v1018 = vadd.f32 %v1016, %v1017
    %v1019 = vsel %vm404, %v921, 0.0
    %v1020 = vadd.f32 %v1018, %v1019
    %v1021 = vsel %vm468, %v922, 0.0
    %v1022 = vadd.f32 %v1020, %v1021
    %1023 = vadd.xlane.f32.xlu0 %v1022
    %v1024 = vpop.xlane.xlu0 %1023
    %v1025 = vadd.f32 %v923, %v924
    %v1026 = vadd.f32 %v1025, %v925
    %v1027 = vadd.f32 %v1026, %v926
    %v1028 = vadd.f32 %v1027, %v927
    %v1029 = vadd.f32 %v1028, %v928
    %v1030 = vadd.f32 %v1029, %v929
    %v1031 = vsel %vm394, %v930, 0.0
    %v1032 = vadd.f32 %v1030, %v1031
    %1033 = vadd.xlane.f32.xlu0 %v1032
    %v1034 = vpop.xlane.xlu0 %1033
    %v1035 = vsel %vm404, %v931, 0.0
    %v1036 = vsel %vm404, %v932, 0.0
    %v1037 = vadd.f32 %v1035, %v1036
    %v1038 = vsel %vm404, %v933, 0.0
    %v1039 = vadd.f32 %v1037, %v1038
    %v1040 = vsel %vm404, %v934, 0.0
    %v1041 = vadd.f32 %v1039, %v1040
    %v1042 = vsel %vm404, %v935, 0.0
    %v1043 = vadd.f32 %v1041, %v1042
    %v1044 = vsel %vm404, %v936, 0.0
    %v1045 = vadd.f32 %v1043, %v1044
    %v1046 = vsel %vm404, %v937, 0.0
    %v1047 = vadd.f32 %v1045, %v1046
    %v1048 = vsel %vm468, %v938, 0.0
    %v1049 = vadd.f32 %v1047, %v1048
    %1050 = vadd.xlane.f32.xlu0 %v1049
    %v1051 = vpop.xlane.xlu0 %1050
    %v1052 = vadd.f32 %v939, %v940
    %v1053 = vadd.f32 %v1052, %v941
    %v1054 = vadd.f32 %v1053, %v942
    %v1055 = vadd.f32 %v1054, %v943
    %v1056 = vadd.f32 %v1055, %v944
    %v1057 = vadd.f32 %v1056, %v945
    %v1058 = vsel %vm394, %v946, 0.0
    %v1059 = vadd.f32 %v1057, %v1058
    %1060 = vadd.xlane.f32.xlu0 %v1059
    %v1061 = vpop.xlane.xlu0 %1060
    %v1062 = vsel %vm404, %v947, 0.0
    %v1063 = vsel %vm404, %v948, 0.0
    %v1064 = vadd.f32 %v1062, %v1063
    %v1065 = vsel %vm404, %v949, 0.0
    %v1066 = vadd.f32 %v1064, %v1065
    %v1067 = vsel %vm404, %v950, 0.0
    %v1068 = vadd.f32 %v1066, %v1067
    %v1069 = vsel %vm404, %v951, 0.0
    %v1070 = vadd.f32 %v1068, %v1069
    %v1071 = vsel %vm404, %v952, 0.0
    %v1072 = vadd.f32 %v1070, %v1071
    %v1073 = vsel %vm404, %v953, 0.0
    %v1074 = vadd.f32 %v1072, %v1073
    %v1075 = vsel %vm468, %v954, 0.0
    %v1076 = vadd.f32 %v1074, %v1075
    %1077 = vadd.xlane.f32.xlu0 %v1076
    %v1078 = vpop.xlane.xlu0 %1077
    %v1079 = vadd.f32 %v955, %v956
    %v1080 = vadd.f32 %v1079, %v957
    %v1081 = vadd.f32 %v1080, %v958
    %v1082 = vadd.f32 %v1081, %v959
    %v1083 = vadd.f32 %v1082, %v960
    %v1084 = vadd.f32 %v1083, %v961
    %v1085 = vsel %vm394, %v962, 0.0
    %v1086 = vadd.f32 %v1084, %v1085
    %1087 = vadd.xlane.f32.xlu0 %v1086
    %v1088 = vpop.xlane.xlu0 %1087
    %v1089 = vsel %vm404, %v963, 0.0
    %v1090 = vsel %vm404, %v964, 0.0
    %v1091 = vadd.f32 %v1089, %v1090
    %v1092 = vsel %vm404, %v965, 0.0
    %v1093 = vadd.f32 %v1091, %v1092
    %v1094 = vsel %vm404, %v966, 0.0
    %v1095 = vadd.f32 %v1093, %v1094
    %v1096 = vsel %vm404, %v967, 0.0
    %v1097 = vadd.f32 %v1095, %v1096
    %v1098 = vsel %vm404, %v968, 0.0
    %v1099 = vadd.f32 %v1097, %v1098
    %v1100 = vsel %vm404, %v969, 0.0
    %v1101 = vadd.f32 %v1099, %v1100
    %v1102 = vsel %vm468, %v970, 0.0
    %v1103 = vadd.f32 %v1101, %v1102
    %1104 = vadd.xlane.f32.xlu0 %v1103
    %v1105 = vpop.xlane.xlu0 %1104
    %vm1106 = vcmask 7168
    %1107 = vst.msk [vmem:[%s3] sm:$0xff] %vm1106, %v980
    %vm1108 = vcmask 6144
    %1109 = vst.msk [vmem:[%s3 + $0x8] sm:$0x7f] %vm1108, %v997
    %1110 = vst.msk [vmem:[%s3 + $0x10] sm:$0xff] %vm1106, %v1007
    %1111 = vst.msk [vmem:[%s3 + $0x18] sm:$0x7f] %vm1108, %v1024
    %1112 = vst.msk [vmem:[%s3 + $0x20] sm:$0xff] %vm1106, %v1034
    %1113 = vst.msk [vmem:[%s3 + $0x28] sm:$0x7f] %vm1108, %v1051
    %1114 = vst.msk [vmem:[%s3 + $0x30] sm:$0xff] %vm1106, %v1061
    %1115 = vst.msk [vmem:[%s3 + $0x38] sm:$0x7f] %vm1108, %v1078
    %1116 = vst.msk [vmem:[%s3 + $0x40] sm:$0xff] %vm1106, %v1088
    %1117 = vst.msk [vmem:[%s3 + $0x48] sm:$0x7f] %vm1108, %v1105
    // Predicated region
    $region18: #{prototypical_loss_pallas.1} parent=1 // pred_check
      _
    $region19: #{prototypical_loss_pallas.1} parent=1 // pred_check_branch
      %1119 = sbr.rel (0) target = $region21
    $region20: #{prototypical_loss_pallas.1} parent=1 // pred_region
      _
    $region21: #{prototypical_loss_pallas.1} parent=1 // pred_fallthru
      _
    // Predicated region
    $region22: #{prototypical_loss_pallas.1} parent=1 // pred_check
      _
    $region23: #{prototypical_loss_pallas.1} parent=1 // pred_check_branch
      %1121 = sbr.rel (0) target = $region25
    $region24: #{prototypical_loss_pallas.1} parent=1 // pred_region
      _
    $region25: #{prototypical_loss_pallas.1} parent=1 // pred_fallthru
      _
    %1122 = vsyncpa [#allocation3], 1

</llo_original>
